<compile_context>
chip_gen: v7x
topology: tpu7x:2x2x1
jax: 0.10.0
libtpu: 0.0.40
codegen_flags: <defaults>
</compile_context>

<pallas_src>
import math
from functools import partial

import jax
import jax.numpy as jnp
from jax.experimental import pallas as pl
from jax.experimental.pallas import tpu as pltpu

# -------- config (small, consistent with the module's forward) --------
B = 2          # batch
T = 8          # sequence length (block_size)
C = 32         # n_embd
N_HEAD = 4     # n_head
HEAD_DIM = C // N_HEAD


def _causal_attn_kernel(x_ref, wqkv_ref, bqkv_ref, wproj_ref, bproj_ref, o_ref,
                        *, batch, seq, n_head, head_dim, matmul_dtype):
    """Single-step kernel over the flattened token slab.

    x_ref:     (B*T, C)    input activations (all batches)
    wqkv_ref:  (C, 3C)     fused q/k/v projection weight
    bqkv_ref:  (1, 3C)     fused q/k/v projection bias
    wproj_ref: (C, C)      output projection weight
    bproj_ref: (1, C)      output projection bias
    o_ref:     (B*T, C)    output slab
    """
    n_tok = batch * seq
    c = n_head * head_dim
    mm = matmul_dtype

    x = x_ref[...].astype(mm)                                        # (N, C)

    # c_attn: fused q/k/v projection -- one MXU matmul over all B*T tokens.
    qkv = jnp.dot(x, wqkv_ref[...].astype(mm),
                  preferred_element_type=jnp.float32)
    qkv = qkv + bqkv_ref[...]                                        # (N, 3C) f32

    q = qkv[:, 0 * c:1 * c]                                          # (N, C)
    k = qkv[:, 1 * c:2 * c]
    v = qkv[:, 2 * c:3 * c]

    # Head-batch once: (H, N, D).  One stack replaces per-head
    # slice + transpose + dot + concat in the attention score path.
    def to_heads(t):
        return jnp.stack(
            [t[:, h * head_dim:(h + 1) * head_dim] for h in range(n_head)],
            axis=0).astype(mm)

    # Fold the softmax scale into q (smaller tensor than the score matrix).
    scale = 1.0 / math.sqrt(head_dim)
    q3 = to_heads(q * scale)                                         # (H, N, D)
    k3 = to_heads(k)
    v3 = to_heads(v)

    # Fused (batch-segment & causal) mask over the flattened token axis.
    # Batch id of each row token, built without integer division (the iota
    # reshape only touches sublanes; lane axis stays n_tok).
    row_b = jax.lax.broadcasted_iota(
        jnp.int32, (batch, seq, n_tok), 0).reshape(n_tok, n_tok)     # (N, N)
    col_b = row_b.T
    row_t = jax.lax.broadcasted_iota(jnp.int32, (n_tok, n_tok), 0)
    col_t = jax.lax.broadcasted_iota(jnp.int32, (n_tok, n_tok), 1)
    mask = (row_b == col_b) & (row_t >= col_t)                       # (N, N)

    # Scores: contract head_dim of both operands directly -- no explicit k.T.
    att = jnp.einsum("hqd,hkd->hqk", q3, k3,
                     preferred_element_type=jnp.float32)             # (H, N, N)
    att = jnp.where(mask[None], att, -1e30)  # finite neg: no inf-inf -> NaN

    # Numerically stable softmax in f32; normalize via EUP reciprocal.
    att = att - jnp.max(att, axis=-1, keepdims=True)
    p = jnp.exp(att)
    p = p * pl.reciprocal(jnp.sum(p, axis=-1, keepdims=True), approx=True)

    y3 = jnp.einsum("hqk,hkd->hqd", p.astype(mm), v3,
                    preferred_element_type=jnp.float32)              # (H, N, D)

    # Heads back onto the feature axis (head-major order, matching
    # y.transpose(1, 2).view(B, T, C) in the PyTorch module).
    y = jnp.concatenate([y3[h] for h in range(n_head)], axis=-1)     # (N, C)

    # c_proj: output projection + bias; single (N, C) lane-dense slab store.
    out = jnp.dot(y.astype(mm), wproj_ref[...].astype(mm),
                  preferred_element_type=jnp.float32)
    out = out + bproj_ref[...]
    o_ref[...] = out.astype(o_ref.dtype)


def causal_self_attention(x, w_qkv, b_qkv, w_proj, b_proj,
                          *, n_head=N_HEAD, matmul_dtype=jnp.float32):
    """x: (B, T, C) float32 -> (B, T, C) float32.

    Weights are (in_features, out_features): y = x @ W + b.
    matmul_dtype: set to jnp.bfloat16 on v6e/v7x at large T/C for full-rate
    MXU; softmax/elementwise math stays f32 regardless.
    """
    Bx, Tx, Cx = x.shape
    head_dim = Cx // n_head
    n_tok = Bx * Tx

    x_flat = x.reshape(n_tok, Cx)                  # one flattened token slab
    b_qkv2 = b_qkv.reshape(1, 3 * Cx)
    b_proj2 = b_proj.reshape(1, Cx)

    kernel = partial(_causal_attn_kernel,
                     batch=Bx, seq=Tx, n_head=n_head, head_dim=head_dim,
                     matmul_dtype=matmul_dtype)

    out_flat = pl.pallas_call(
        kernel,
        out_shape=jax.ShapeDtypeStruct((n_tok, Cx), x.dtype),
        grid_spec=pltpu.PrefetchScalarGridSpec(
            num_scalar_prefetch=0,
            grid=(1,),                                               # single step
            in_specs=[
                pl.BlockSpec((n_tok, Cx), lambda i: (0, 0)),         # x (flat)
                pl.BlockSpec((Cx, 3 * Cx), lambda i: (0, 0)),        # w_qkv
                pl.BlockSpec((1, 3 * Cx), lambda i: (0, 0)),         # b_qkv
                pl.BlockSpec((Cx, Cx), lambda i: (0, 0)),            # w_proj
                pl.BlockSpec((1, Cx), lambda i: (0, 0)),             # b_proj
            ],
            out_specs=pl.BlockSpec((n_tok, Cx), lambda i: (0, 0)),
        ),
        compiler_params=pltpu.CompilerParams(
            dimension_semantics=("arbitrary",),
        ),
    )(x_flat, w_qkv, b_qkv2, w_proj, b_proj2)

    return out_flat.reshape(Bx, Tx, Cx)


def _reference(x, w_qkv, b_qkv, w_proj, b_proj):
    """Pure-JAX reference mirroring the PyTorch forward (eval mode)."""
    Bx, Tx, Cx = x.shape
    qkv = jnp.einsum("btc,cd->btd", x, w_qkv) + b_qkv
    q, k, v = jnp.split(qkv, 3, axis=-1)

    def to_heads(t):
        return t.reshape(Bx, Tx, N_HEAD, HEAD_DIM).transpose(0, 2, 1, 3)

    q, k, v = to_heads(q), to_heads(k), to_heads(v)
    att = jnp.einsum("bhqd,bhkd->bhqk", q, k) / math.sqrt(HEAD_DIM)
    mask = jnp.tril(jnp.ones((Tx, Tx), dtype=bool))
    att = jnp.where(mask[None, None], att, -jnp.inf)
    att = jax.nn.softmax(att, axis=-1)
    y = jnp.einsum("bhqk,bhkd->bhqd", att, v)
    y = y.transpose(0, 2, 1, 3).reshape(Bx, Tx, Cx)
    return jnp.einsum("btc,cd->btd", y, w_proj) + b_proj


if __name__ == "__main__":
    key = jax.random.PRNGKey(0)
    kx, k1, k2, k3, k4 = jax.random.split(key, 5)

    # deterministic synthetic parameters (shapes from nn.Linear in __init__)
    x = jax.random.normal(kx, (B, T, C), dtype=jnp.float32)
    w_qkv = jax.random.normal(k1, (C, 3 * C), dtype=jnp.float32) * 0.02
    b_qkv = jax.random.normal(k2, (3 * C,), dtype=jnp.float32) * 0.02
    w_proj = jax.random.normal(k3, (C, C), dtype=jnp.float32) * 0.02
    b_proj = jax.random.normal(k4, (C,), dtype=jnp.float32) * 0.02

    out = causal_self_attention(x, w_qkv, b_qkv, w_proj, b_proj)
    out = jax.block_until_ready(out)

    ref = _reference(x, w_qkv, b_qkv, w_proj, b_proj)
    assert out.shape == (B, T, C)
    assert jnp.allclose(out, ref, atol=2e-4, rtol=2e-3), "mismatch vs reference"

    print("KERNEL_OK")
</pallas_src>

<mosaic_0001>
module attributes {stable_mosaic.version = 11 : i64} {
  func.func @_causal_attn_kernel(%arg0: i32, %arg1: memref<16x32xf32, #tpu.memory_space<vmem>>, %arg2: memref<32x96xf32, #tpu.memory_space<vmem>>, %arg3: memref<1x96xf32, #tpu.memory_space<vmem>>, %arg4: memref<32x32xf32, #tpu.memory_space<vmem>>, %arg5: memref<1x32xf32, #tpu.memory_space<vmem>>, %arg6: memref<16x32xf32, #tpu.memory_space<vmem>>) attributes {dimension_semantics = [#tpu.dimension_semantics<arbitrary>], iteration_bounds = array<i64: 1>, scalar_prefetch = 0 : i64, scratch_operands = 0 : i64, tpu.core_type = #tpu.core_type<tc>, window_params = [{pipeline_mode = #tpu.pipeline_mode<synchronous>, transform_indices = @transform_0, window_bounds = array<i64: 16, 32>}, {pipeline_mode = #tpu.pipeline_mode<synchronous>, transform_indices = @transform_1, window_bounds = array<i64: 32, 96>}, {pipeline_mode = #tpu.pipeline_mode<synchronous>, transform_indices = @transform_2, window_bounds = array<i64: 1, 96>}, {pipeline_mode = #tpu.pipeline_mode<synchronous>, transform_indices = @transform_3, window_bounds = array<i64: 32, 32>}, {pipeline_mode = #tpu.pipeline_mode<synchronous>, transform_indices = @transform_4, window_bounds = array<i64: 1, 32>}, {pipeline_mode = #tpu.pipeline_mode<synchronous>, transform_indices = @transform_5, window_bounds = array<i64: 16, 32>}]} {
    %c0 = arith.constant 0 : index
    %c0_0 = arith.constant 0 : index
    %0 = vector.load %arg1[%c0, %c0_0] : memref<16x32xf32, #tpu.memory_space<vmem>>, vector<16x32xf32>
    %c0_1 = arith.constant 0 : index
    %c0_2 = arith.constant 0 : index
    %1 = vector.load %arg2[%c0_1, %c0_2] : memref<32x96xf32, #tpu.memory_space<vmem>>, vector<32x96xf32>
    %cst = arith.constant dense<0.000000e+00> : vector<16x96xf32>
    %2 = tpu.matmul %0, %1, %cst {dimension_numbers = #tpu.dot_dimension_numbers<[1], [0], [0], [1], [0, 0, 1, 1], [], []>} : vector<16x32xf32>, vector<32x96xf32>, vector<16x96xf32> -> vector<16x96xf32>
    %c0_3 = arith.constant 0 : index
    %c0_4 = arith.constant 0 : index
    %3 = vector.load %arg3[%c0_3, %c0_4] : memref<1x96xf32, #tpu.memory_space<vmem>>, vector<1x96xf32>
    %4 = vector.broadcast %3 : vector<1x96xf32> to vector<16x96xf32>
    %5 = arith.addf %2, %4 : vector<16x96xf32>
    %6 = vector.extract_strided_slice %5 {offsets = [0, 0], sizes = [16, 32], strides = [1, 1]} : vector<16x96xf32> to vector<16x32xf32>
    %7 = vector.extract_strided_slice %5 {offsets = [0, 32], sizes = [16, 32], strides = [1, 1]} : vector<16x96xf32> to vector<16x32xf32>
    %8 = vector.extract_strided_slice %5 {offsets = [0, 64], sizes = [16, 32], strides = [1, 1]} : vector<16x96xf32> to vector<16x32xf32>
    %cst_5 = arith.constant 0.353553385 : f32
    %9 = vector.broadcast %cst_5 : f32 to vector<16x32xf32>
    %10 = arith.mulf %6, %9 : vector<16x32xf32>
    %11 = vector.extract_strided_slice %10 {offsets = [0, 0], sizes = [16, 8], strides = [1, 1]} : vector<16x32xf32> to vector<16x8xf32>
    %12 = vector.extract_strided_slice %10 {offsets = [0, 8], sizes = [16, 8], strides = [1, 1]} : vector<16x32xf32> to vector<16x8xf32>
    %13 = vector.extract_strided_slice %10 {offsets = [0, 16], sizes = [16, 8], strides = [1, 1]} : vector<16x32xf32> to vector<16x8xf32>
    %14 = vector.extract_strided_slice %10 {offsets = [0, 24], sizes = [16, 8], strides = [1, 1]} : vector<16x32xf32> to vector<16x8xf32>
    %15 = vector.shape_cast %11 : vector<16x8xf32> to vector<1x16x8xf32>
    %16 = vector.shape_cast %12 : vector<16x8xf32> to vector<1x16x8xf32>
    %17 = vector.shape_cast %13 : vector<16x8xf32> to vector<1x16x8xf32>
    %18 = vector.shape_cast %14 : vector<16x8xf32> to vector<1x16x8xf32>
    %19 = tpu.concatenate %15, %16, %17, %18 in 0 : vector<1x16x8xf32>, vector<1x16x8xf32>, vector<1x16x8xf32>, vector<1x16x8xf32> -> vector<4x16x8xf32>
    %20 = vector.extract_strided_slice %7 {offsets = [0, 0], sizes = [16, 8], strides = [1, 1]} : vector<16x32xf32> to vector<16x8xf32>
    %21 = vector.extract_strided_slice %7 {offsets = [0, 8], sizes = [16, 8], strides = [1, 1]} : vector<16x32xf32> to vector<16x8xf32>
    %22 = vector.extract_strided_slice %7 {offsets = [0, 16], sizes = [16, 8], strides = [1, 1]} : vector<16x32xf32> to vector<16x8xf32>
    %23 = vector.extract_strided_slice %7 {offsets = [0, 24], sizes = [16, 8], strides = [1, 1]} : vector<16x32xf32> to vector<16x8xf32>
    %24 = vector.shape_cast %20 : vector<16x8xf32> to vector<1x16x8xf32>
    %25 = vector.shape_cast %21 : vector<16x8xf32> to vector<1x16x8xf32>
    %26 = vector.shape_cast %22 : vector<16x8xf32> to vector<1x16x8xf32>
    %27 = vector.shape_cast %23 : vector<16x8xf32> to vector<1x16x8xf32>
    %28 = tpu.concatenate %24, %25, %26, %27 in 0 : vector<1x16x8xf32>, vector<1x16x8xf32>, vector<1x16x8xf32>, vector<1x16x8xf32> -> vector<4x16x8xf32>
    %29 = vector.extract_strided_slice %8 {offsets = [0, 0], sizes = [16, 8], strides = [1, 1]} : vector<16x32xf32> to vector<16x8xf32>
    %30 = vector.extract_strided_slice %8 {offsets = [0, 8], sizes = [16, 8], strides = [1, 1]} : vector<16x32xf32> to vector<16x8xf32>
    %31 = vector.extract_strided_slice %8 {offsets = [0, 16], sizes = [16, 8], strides = [1, 1]} : vector<16x32xf32> to vector<16x8xf32>
    %32 = vector.extract_strided_slice %8 {offsets = [0, 24], sizes = [16, 8], strides = [1, 1]} : vector<16x32xf32> to vector<16x8xf32>
    %33 = vector.shape_cast %29 : vector<16x8xf32> to vector<1x16x8xf32>
    %34 = vector.shape_cast %30 : vector<16x8xf32> to vector<1x16x8xf32>
    %35 = vector.shape_cast %31 : vector<16x8xf32> to vector<1x16x8xf32>
    %36 = vector.shape_cast %32 : vector<16x8xf32> to vector<1x16x8xf32>
    %37 = tpu.concatenate %33, %34, %35, %36 in 0 : vector<1x16x8xf32>, vector<1x16x8xf32>, vector<1x16x8xf32>, vector<1x16x8xf32> -> vector<4x16x8xf32>
    %38 = tpu.iota {dimensions = array<i32: 0>} : vector<2x8x16xi32>
    %39 = vector.shape_cast %38 : vector<2x8x16xi32> to vector<16x16xi32>
    %40 = tpu.transpose %39, [1, 0] : vector<16x16xi32> -> vector<16x16xi32>
    %41 = tpu.iota {dimensions = array<i32: 0>} : vector<16x16xi32>
    %42 = tpu.iota {dimensions = array<i32: 1>} : vector<16x16xi32>
    %43 = arith.cmpi eq, %39, %40 : vector<16x16xi32>
    %44 = arith.cmpi sge, %41, %42 : vector<16x16xi32>
    %45 = arith.andi %43, %44 : vector<16x16xi1>
    "tpu.trace_start"() <{level = 10 : i32, message = "hqd,hkd->hqk"}> : () -> ()
    %cst_6 = arith.constant dense<0.000000e+00> : vector<4x16x16xf32>
    %46 = tpu.matmul %19, %28, %cst_6 {dimension_numbers = #tpu.dot_dimension_numbers<[2], [2], [1], [1], [0, 0, 0, 1, 1, 1], [0], [0]>} : vector<4x16x8xf32>, vector<4x16x8xf32>, vector<4x16x16xf32> -> vector<4x16x16xf32>
    "tpu.trace_stop"() : () -> ()
    %47 = vector.shape_cast %45 : vector<16x16xi1> to vector<1x16x16xi1>
    %cst_7 = arith.constant -1.000000e+30 : f32
    %48 = vector.shape_cast %47 : vector<1x16x16xi1> to vector<1x16x16xi1>
    %49 = vector.broadcast %48 : vector<1x16x16xi1> to vector<4x16x16xi1>
    %50 = vector.broadcast %cst_7 : f32 to vector<4x16x16xf32>
    %51 = arith.select %49, %46, %50 : vector<4x16x16xi1>, vector<4x16x16xf32>
    %cst_8 = arith.constant dense<0xFF800000> : vector<4x16xf32>
    %52 = vector.multi_reduction <maximumf>, %51, %cst_8 [2] : vector<4x16x16xf32> to vector<4x16xf32>
    %53 = vector.shape_cast %52 : vector<4x16xf32> to vector<4x16x1xf32>
    %54 = vector.broadcast %53 : vector<4x16x1xf32> to vector<4x16x16xf32>
    %55 = arith.subf %51, %54 : vector<4x16x16xf32>
    %56 = math.exp %55 : vector<4x16x16xf32>
    %cst_9 = arith.constant dense<0.000000e+00> : vector<4x16xf32>
    %57 = vector.multi_reduction <add>, %56, %cst_9 [2] : vector<4x16x16xf32> to vector<4x16xf32>
    %58 = vector.shape_cast %57 : vector<4x16xf32> to vector<4x16x1xf32>
    %59 = tpu.reciprocal %58 {approx = true} : vector<4x16x1xf32> -> vector<4x16x1xf32>
    %60 = vector.broadcast %59 : vector<4x16x1xf32> to vector<4x16x16xf32>
    %61 = arith.mulf %56, %60 : vector<4x16x16xf32>
    "tpu.trace_start"() <{level = 10 : i32, message = "hqk,hkd->hqd"}> : () -> ()
    %cst_10 = arith.constant dense<0.000000e+00> : vector<4x16x8xf32>
    %62 = tpu.matmul %61, %37, %cst_10 {dimension_numbers = #tpu.dot_dimension_numbers<[2], [1], [1], [2], [0, 0, 0, 1, 1, 2], [0], [0]>} : vector<4x16x16xf32>, vector<4x16x8xf32>, vector<4x16x8xf32> -> vector<4x16x8xf32>
    "tpu.trace_stop"() : () -> ()
    %63 = vector.extract_strided_slice %62 {offsets = [0, 0, 0], sizes = [1, 16, 8], strides = [1, 1, 1]} : vector<4x16x8xf32> to vector<1x16x8xf32>
    %64 = vector.shape_cast %63 : vector<1x16x8xf32> to vector<16x8xf32>
    %65 = vector.extract_strided_slice %62 {offsets = [1, 0, 0], sizes = [1, 16, 8], strides = [1, 1, 1]} : vector<4x16x8xf32> to vector<1x16x8xf32>
    %66 = vector.shape_cast %65 : vector<1x16x8xf32> to vector<16x8xf32>
    %67 = vector.extract_strided_slice %62 {offsets = [2, 0, 0], sizes = [1, 16, 8], strides = [1, 1, 1]} : vector<4x16x8xf32> to vector<1x16x8xf32>
    %68 = vector.shape_cast %67 : vector<1x16x8xf32> to vector<16x8xf32>
    %69 = vector.extract_strided_slice %62 {offsets = [3, 0, 0], sizes = [1, 16, 8], strides = [1, 1, 1]} : vector<4x16x8xf32> to vector<1x16x8xf32>
    %70 = vector.shape_cast %69 : vector<1x16x8xf32> to vector<16x8xf32>
    %71 = tpu.concatenate %64, %66, %68, %70 in 1 : vector<16x8xf32>, vector<16x8xf32>, vector<16x8xf32>, vector<16x8xf32> -> vector<16x32xf32>
    %c0_11 = arith.constant 0 : index
    %c0_12 = arith.constant 0 : index
    %72 = vector.load %arg4[%c0_11, %c0_12] : memref<32x32xf32, #tpu.memory_space<vmem>>, vector<32x32xf32>
    %cst_13 = arith.constant dense<0.000000e+00> : vector<16x32xf32>
    %73 = tpu.matmul %71, %72, %cst_13 {dimension_numbers = #tpu.dot_dimension_numbers<[1], [0], [0], [1], [0, 0, 1, 1], [], []>} : vector<16x32xf32>, vector<32x32xf32>, vector<16x32xf32> -> vector<16x32xf32>
    %c0_14 = arith.constant 0 : index
    %c0_15 = arith.constant 0 : index
    %74 = vector.load %arg5[%c0_14, %c0_15] : memref<1x32xf32, #tpu.memory_space<vmem>>, vector<1x32xf32>
    %75 = vector.broadcast %74 : vector<1x32xf32> to vector<16x32xf32>
    %76 = arith.addf %73, %75 : vector<16x32xf32>
    %c0_16 = arith.constant 0 : index
    %c0_17 = arith.constant 0 : index
    %77 = vector.load %arg6[%c0_16, %c0_17] : memref<16x32xf32, #tpu.memory_space<vmem>>, vector<16x32xf32>
    tpu.vector_store %arg6[%c0_16, %c0_17], %76 {strides = array<i32>} : memref<16x32xf32, #tpu.memory_space<vmem>>, vector<16x32xf32>,
    return
  }
  func.func @transform_0(%arg0: i32) -> (i32, i32) {
    %c0_i32 = arith.constant 0 : i32
    %c0_i32_0 = arith.constant 0 : i32
    %c0_i32_1 = arith.constant 0 : i32
    return %c0_i32, %c0_i32_0 : i32, i32
  }
  func.func @transform_1(%arg0: i32) -> (i32, i32) {
    %c0_i32 = arith.constant 0 : i32
    %c0_i32_0 = arith.constant 0 : i32
    %c0_i32_1 = arith.constant 0 : i32
    return %c0_i32, %c0_i32_0 : i32, i32
  }
  func.func @transform_2(%arg0: i32) -> (i32, i32) {
    %c0_i32 = arith.constant 0 : i32
    %c0_i32_0 = arith.constant 0 : i32
    %c0_i32_1 = arith.constant 0 : i32
    return %c0_i32, %c0_i32_0 : i32, i32
  }
  func.func @transform_3(%arg0: i32) -> (i32, i32) {
    %c0_i32 = arith.constant 0 : i32
    %c0_i32_0 = arith.constant 0 : i32
    %c0_i32_1 = arith.constant 0 : i32
    return %c0_i32, %c0_i32_0 : i32, i32
  }
  func.func @transform_4(%arg0: i32) -> (i32, i32) {
    %c0_i32 = arith.constant 0 : i32
    %c0_i32_0 = arith.constant 0 : i32
    %c0_i32_1 = arith.constant 0 : i32
    return %c0_i32, %c0_i32_0 : i32, i32
  }
  func.func @transform_5(%arg0: i32) -> (i32, i32) {
    %c0_i32 = arith.constant 0 : i32
    %c0_i32_0 = arith.constant 0 : i32
    %c0_i32_1 = arith.constant 0 : i32
    return %c0_i32, %c0_i32_0 : i32, i32
  }
}

</mosaic_0001>

<llo_original>
// kernel: tpu_custom_call.1
$region0: #{tpu_custom_call.1}
  #allocation0 [shape = 'u32[]', space=smem, size = 0x4, offset = 0x4, fixed_abs, tag = 'smem constant byte address 0x4 - core index']
  #allocation1 [shape = 'u32[144,128]{1,0:T(1,128)}', space=vmem, size = 0x12000, scoped, tag = 'internal scratch']
  %s0 = inlined_call_operand.hbm [shape: f32[16,32], index: 0, kind: input, shape index: {}]
  %s1 = inlined_call_operand.hbm [shape: f32[32,96], index: 1, kind: input, shape index: {}]
  %s2 = inlined_call_operand.vmem [shape: f32[1,96], index: 2, kind: input, shape index: {}]
  %s3 = inlined_call_operand.hbm [shape: f32[32,32], index: 3, kind: input, shape index: {}]
  %s4 = inlined_call_operand.vmem [shape: f32[1,32], index: 4, kind: input, shape index: {}]
  %s5 = inlined_call_operand.hbm [shape: f32[16,32], index: 5, kind: output, shape index: {}]
  %s6 = sld [smem:[#allocation0]]
  $region42: #{tpu_custom_call.1} parent=0
    _
  %s8 = ssub.s32 1, %s6
  %s9 = scalar_select 0, %s8, %s6
  $region1: #{tpu_custom_call.1} parent=0
    #allocation2 [shape = 'u8[8192]{0}', space=vmem, size = 0x2000, scoped, tag = 'input window, operand 0, single buffered']
    #allocation3 [shape = 's32[1]{0}', space=sflag, size = 0x4, scoped, tag = 'scoped memory for tpu_custom_call.1']
    #allocation4 [shape = 's32[1]{0}', space=sflag, size = 0x4, scoped, tag = 'scoped memory for tpu_custom_call.1']
    #allocation5 [shape = 'u8[16384]{0}', space=vmem, size = 0x4000, scoped, tag = 'input window, operand 1, single buffered']
    #allocation6 [shape = 's32[1]{0}', space=sflag, size = 0x4, scoped, tag = 'scoped memory for tpu_custom_call.1']
    #allocation7 [shape = 'u8[16384]{0}', space=vmem, size = 0x4000, scoped, tag = 'input window, operand 3, single buffered']
    #allocation8 [shape = 'u8[8192]{0}', space=vmem, size = 0x2000, scoped, tag = 'output window, operand 0, single buffered']
    %10 = vsyncpa [#allocation3], 0
    %11 = vsyncpa [#allocation6], 0
    %12 = vsyncpa [#allocation4], 0
    // Predicated region
    $region2: #{tpu_custom_call.1} parent=1 // pred_check
      _
    $region3: #{tpu_custom_call.1} parent=1 // pred_check_branch
      %14 = sbr.rel (0) target = $region5
    $region4: #{tpu_custom_call.1} parent=1 // pred_region
      %s16 = ssub.s32 256, 256
      %17 = vsyncadd [#allocation3], %s16
      %s18 = sshll.u32 [#allocation2], 4
      %s19 = int_to_ptr.vmem [resolvable:$true] %s18
      %24 = dma.hbm_to_vmem [thread:$0]  %s0, 256, %s19, [#allocation3], 128, 128, 8
    $region5: #{tpu_custom_call.1} parent=1 // pred_fallthru
      _
    // Predicated region
    $region6: #{tpu_custom_call.1} parent=1 // pred_check
      _
    $region7: #{tpu_custom_call.1} parent=1 // pred_check_branch
      %26 = sbr.rel (0) target = $region9
    $region8: #{tpu_custom_call.1} parent=1 // pred_region
      %s28 = ssub.s32 512, 512
      %29 = vsyncadd [#allocation6], %s28
      %s30 = sshll.u32 [#allocation5], 4
      %s31 = int_to_ptr.vmem [resolvable:$true] %s30
      %36 = dma.hbm_to_vmem [thread:$0]  %s1, 512, %s31, [#allocation6], 128, 128, 8
    $region9: #{tpu_custom_call.1} parent=1 // pred_fallthru
      _
    // Predicated region
    $region10: #{tpu_custom_call.1} parent=1 // pred_check
      _
    $region11: #{tpu_custom_call.1} parent=1 // pred_check_branch
      %38 = sbr.rel (0) target = $region13
    $region12: #{tpu_custom_call.1} parent=1 // pred_region
      _
    $region13: #{tpu_custom_call.1} parent=1 // pred_fallthru
      _
    // Predicated region
    $region14: #{tpu_custom_call.1} parent=1 // pred_check
      _
    $region15: #{tpu_custom_call.1} parent=1 // pred_check_branch
      %40 = sbr.rel (0) target = $region17
    $region16: #{tpu_custom_call.1} parent=1 // pred_region
      %s42 = ssub.s32 512, 512
      %43 = vsyncadd [#allocation6], %s42
      %s44 = sshll.u32 [#allocation7], 4
      %s45 = int_to_ptr.vmem [resolvable:$true] %s44
      %50 = dma.hbm_to_vmem [thread:$0]  %s3, 512, %s45, [#allocation6], 128, 128, 8
    $region17: #{tpu_custom_call.1} parent=1 // pred_fallthru
      _
    // Predicated region
    $region18: #{tpu_custom_call.1} parent=1 // pred_check
      _
    $region19: #{tpu_custom_call.1} parent=1 // pred_check_branch
      %52 = sbr.rel (0) target = $region21
    $region20: #{tpu_custom_call.1} parent=1 // pred_region
      _
    $region21: #{tpu_custom_call.1} parent=1 // pred_fallthru
      _
    // Predicated region
    $region22: #{tpu_custom_call.1} parent=1 // pred_check
      _
    $region23: #{tpu_custom_call.1} parent=1 // pred_check_branch
      %54 = sbr.rel (0) target = $region25
    $region24: #{tpu_custom_call.1} parent=1 // pred_region
      %55 = dma.done [#allocation3], 256
    $region25: #{tpu_custom_call.1} parent=1 // pred_fallthru
      _
    // Predicated region
    $region26: #{tpu_custom_call.1} parent=1 // pred_check
      _
    $region27: #{tpu_custom_call.1} parent=1 // pred_check_branch
      %57 = sbr.rel (0) target = $region29
    $region28: #{tpu_custom_call.1} parent=1 // pred_region
      %58 = dma.done [#allocation6], 512
    $region29: #{tpu_custom_call.1} parent=1 // pred_fallthru
      _
    // Predicated region
    $region30: #{tpu_custom_call.1} parent=1 // pred_check
      _
    $region31: #{tpu_custom_call.1} parent=1 // pred_check_branch
      %60 = sbr.rel (0) target = $region33
    $region32: #{tpu_custom_call.1} parent=1 // pred_region
      %61 = dma.done [#allocation6], 512
    $region33: #{tpu_custom_call.1} parent=1 // pred_fallthru
      _
    %v62 = vld [vmem:[#allocation2] sm:$0xff]
    %v63 = vld [vmem:[#allocation2 + $0x8] sm:$0xff]
    %v64 = vld [vmem:[#allocation5] sm:$0xff]
    %v65 = vld [vmem:[#allocation5 + $0x8] sm:$0xff]
    %v66 = vld [vmem:[#allocation5 + $0x10] sm:$0xff]
    %v67 = vld [vmem:[#allocation5 + $0x18] sm:$0xff]
    %v68 = vld [vmem:[%s2] sm:$0x1]
    %v70 = vlaneseq
    %v71 = vshrl.u32 %v70, 7
    %v72 = vsub.s32 0, %v71
    %v73 = vrot.slane %v68, %v72
    %vm75 = vcmask 261120
    %v77 = vsel %vm75, %v62, 0
    %v80 = vsel %vm75, %v63, 0
    %82 = vmatprep.subr.mxu0 0.0
    %83 = vmatpush1.msra.mxu0 %v64
    %84 = vmatprep.subr.mxu0 0.0
    %85 = vmatpush1.msra.mxu0 %v65
    %86 = vmatprep.subr.mxu0 0.0
    %87 = vmatpush1.msra.mxu0 %v66
    %88 = vmatprep.subr.mxu0 0.0
    %89 = vmatpush1.msra.mxu0 %v67
    %90 = vmatprep.subr.mxu0 0.0
    %91 = vmatpush1.msra.mxu0 0.0
    %92 = vmatprep.subr.mxu0 0.0
    %93 = vmatpush1.msra.mxu0 0.0
    %94 = vmatprep.subr.mxu0 0.0
    %95 = vmatpush1.msra.mxu0 0.0
    %96 = vmatprep.subr.mxu0 0.0
    %97 = vmatpush1.msra.mxu0 0.0
    %98 = vmatprep.subr.mxu0 0.0
    %99 = vmatpush1.msra.mxu0 0.0
    %100 = vmatprep.subr.mxu0 0.0
    %101 = vmatpush1.msra.mxu0 0.0
    %102 = vmatprep.subr.mxu0 0.0
    %103 = vmatpush1.msra.mxu0 0.0
    %104 = vmatprep.subr.mxu0 0.0
    %105 = vmatpush1.msra.mxu0 0.0
    %106 = vmatprep.subr.mxu0 0.0
    %107 = vmatpush1.msra.mxu0 0.0
    %108 = vmatprep.subr.mxu0 0.0
    %109 = vmatpush1.msra.mxu0 0.0
    %110 = vmatprep.subr.mxu0 0.0
    %111 = vmatpush1.msra.mxu0 0.0
    %112 = vmatprep.subr.mxu0 0.0
    %113 = vmatpush1.msra.mxu0 0.0
    %114 = vmatprep.subr.mxu0 0.0
    %115 = vmatpush1.msra.mxu0 0.0
    %116 = vmatprep.subr.mxu0 0.0
    %117 = vmatpush1.msra.mxu0 0.0
    %118 = vmatprep.subr.mxu0 0.0
    %119 = vmatpush1.msra.mxu0 0.0
    %120 = vmatprep.subr.mxu0 0.0
    %121 = vmatpush1.msra.mxu0 0.0
    %122 = vmatprep.subr.mxu0 0.0
    %123 = vmatpush1.msra.mxu0 0.0
    %124 = vmatprep.subr.mxu0 0.0
    %125 = vmatpush1.msra.mxu0 0.0
    %126 = vmatprep.subr.mxu0 0.0
    %127 = vmatpush1.msra.mxu0 0.0
    %128 = vmatprep.subr.mxu0 0.0
    %129 = vmatpush1.msra.mxu0 0.0
    %130 = vmatprep.subr.mxu0 0.0
    %131 = vmatpush1.msra.mxu0 0.0
    %132 = vmatprep.subr.mxu0 0.0
    %133 = vmatpush1.msra.mxu0 0.0
    %134 = vmatprep.subr.mxu0 0.0
    %135 = vmatpush1.msra.mxu0 0.0
    %136 = vmatprep.subr.mxu0 0.0
    %137 = vmatpush1.msra.mxu0 0.0
    %138 = vmatprep.subr.mxu0 0.0
    %139 = vmatpush1.msra.mxu0 0.0
    %140 = vmatprep.subr.mxu0 0.0
    %141 = vmatpush1.msra.mxu0 0.0
    %142 = vmatprep.subr.mxu0 0.0
    %143 = vmatpush1.msra.mxu0 0.0
    %144 = vmatprep.subr.mxu0 0.0
    %145 = vmatpush1.msra.mxu0 0.0
    %146 = vmatprep.mubr.f32.mxu0 0.0
    %147 = vmatmul.mubr.f32.gmra.mrb[0].mxu0 %v77
    %v148 = vpop.f32.mrb[0].mxu0
    %v149 = vadd.f32 %v73, %v148
    %v150 = vpop.f32.mrb[0].mxu0
    %151 = vmatprep.mubr.f32.mxu0 0.0
    %152 = vmatmul.mubr.f32.gmra.mrb[0].mxu0 %v80
    %v153 = vpop.f32.mrb[0].mxu0
    %v154 = vadd.f32 %v73, %v153
    %v155 = vpop.f32.mrb[0].mxu0
    %156 = vdwg.mxu0
    %v157 = vmul.f32 %v149, 0.35355338
    %v158 = vmul.f32 %v154, 0.35355338
    %161 = vrot.lane.b32.xlu0 %v157, 120
    %v162 = vpop.permute.xlu0 %161
    %163 = vrot.lane.b32.xlu0 %v158, 120
    %v164 = vpop.permute.xlu0 %163
    %165 = vrot.lane.b32.xlu0 %v157, 112
    %v166 = vpop.permute.xlu0 %165
    %167 = vrot.lane.b32.xlu0 %v158, 112
    %v168 = vpop.permute.xlu0 %167
    %169 = vrot.lane.b32.xlu0 %v157, 104
    %v170 = vpop.permute.xlu0 %169
    %171 = vrot.lane.b32.xlu0 %v158, 104
    %v172 = vpop.permute.xlu0 %171
    %175 = vrot.lane.b32.xlu0 %v149, 120
    %v176 = vpop.permute.xlu0 %175
    %177 = vrot.lane.b32.xlu0 %v154, 120
    %v178 = vpop.permute.xlu0 %177
    %179 = vrot.lane.b32.xlu0 %v149, 112
    %v180 = vpop.permute.xlu0 %179
    %181 = vrot.lane.b32.xlu0 %v154, 112
    %v182 = vpop.permute.xlu0 %181
    %183 = vrot.lane.b32.xlu0 %v149, 104
    %v184 = vpop.permute.xlu0 %183
    %185 = vrot.lane.b32.xlu0 %v154, 104
    %v186 = vpop.permute.xlu0 %185
    %187 = vxpose.xlu0.b32.start [1/16] 0, 128
    %188 = vxpose.xlu0.b32.cont [2/16] 1, 128
    %189 = vxpose.xlu0.b32.cont [3/16] 0, 128
    %190 = vxpose.xlu0.b32.cont [4/16] 0, 128
    %191 = vxpose.xlu0.b32.cont [5/16] 0, 128
    %192 = vxpose.xlu0.b32.cont [6/16] 0, 128
    %193 = vxpose.xlu0.b32.cont [7/16] 0, 128
    %194 = vxpose.xlu0.b32.cont [8/16] 0, 128
    %195 = vxpose.xlu0.b32.cont [9/16] 0, 128
    %196 = vxpose.xlu0.b32.cont [10/16] 0, 128
    %197 = vxpose.xlu0.b32.cont [11/16] 0, 128
    %198 = vxpose.xlu0.b32.cont [12/16] 0, 128
    %199 = vxpose.xlu0.b32.cont [13/16] 0, 128
    %200 = vxpose.xlu0.b32.cont [14/16] 0, 128
    %201 = vxpose.xlu0.b32.cont [15/16] 0, 128
    %202 = vxpose.xlu0.b32.end [16/16] 0, 128
    %v203 = vpop.trf.xlu0
    %v204 = vpop.trf.xlu0
    %v205 = vpop.trf.xlu0
    %v206 = vpop.trf.xlu0
    %v207 = vpop.trf.xlu0
    %v208 = vpop.trf.xlu0
    %v209 = vpop.trf.xlu0
    %v210 = vpop.trf.xlu0
    %v211 = vpop.trf.xlu0
    %v212 = vpop.trf.xlu0
    %v213 = vpop.trf.xlu0
    %v214 = vpop.trf.xlu0
    %v215 = vpop.trf.xlu0
    %v216 = vpop.trf.xlu0
    %v217 = vpop.trf.xlu0
    %v218 = vpop.trf.xlu0
    %v219 = vlaneseq
    %v220 = vshrl.u32 %v219, 7
    %v221 = vadd.s32 %v220, 8
    %v222 = vlaneseq
    %v223 = vand.u32 %v222, 127
    %vm224 = vcmp.eq.s32.totalorder %v203, 0
    %vm225 = vcmp.eq.s32.totalorder %v204, 1
    %vm226 = vcmp.ge.s32.totalorder %v220, %v223
    %vm227 = vcmp.ge.s32.totalorder %v221, %v223
    %vm228 = vmand %vm224, %vm226
    %vm229 = vmand %vm225, %vm227
    %230 = vrot.lane.b32.xlu0 %v149, 96
    %v231 = vpop.permute.xlu0 %230
    %232 = vrot.lane.b32.xlu0 %v154, 96
    %v233 = vpop.permute.xlu0 %232
    %vm234 = vcmask 64512
    %v235 = vsel %vm234, %v157, 0
    %v237 = vsel %vm234, %v158, 0
    %v239 = vsel %vm234, %v231, 0
    %v241 = vsel %vm234, %v233, 0
    %243 = vmatprep.subr.mxu0 0.0
    %244 = vmatpush1.xpose.msra.mxu0 %v239
    %245 = vmatprep.subr.mxu0 0.0
    %246 = vmatpush1.xpose.msra.mxu0 %v241
    %247 = vmatprep.subr.mxu0 0.0
    %248 = vmatpush1.xpose.msra.mxu0 0.0
    %249 = vmatprep.subr.mxu0 0.0
    %250 = vmatpush1.xpose.msra.mxu0 0.0
    %251 = vmatprep.subr.mxu0 0.0
    %252 = vmatpush1.xpose.msra.mxu0 0.0
    %253 = vmatprep.subr.mxu0 0.0
    %254 = vmatpush1.xpose.msra.mxu0 0.0
    %255 = vmatprep.subr.mxu0 0.0
    %256 = vmatpush1.xpose.msra.mxu0 0.0
    %257 = vmatprep.subr.mxu0 0.0
    %258 = vmatpush1.xpose.msra.mxu0 0.0
    %259 = vmatprep.subr.mxu0 0.0
    %260 = vmatpush1.xpose.msra.mxu0 0.0
    %261 = vmatprep.subr.mxu0 0.0
    %262 = vmatpush1.xpose.msra.mxu0 0.0
    %263 = vmatprep.subr.mxu0 0.0
    %264 = vmatpush1.xpose.msra.mxu0 0.0
    %265 = vmatprep.subr.mxu0 0.0
    %266 = vmatpush1.xpose.msra.mxu0 0.0
    %267 = vmatprep.subr.mxu0 0.0
    %268 = vmatpush1.xpose.msra.mxu0 0.0
    %269 = vmatprep.subr.mxu0 0.0
    %270 = vmatpush1.xpose.msra.mxu0 0.0
    %271 = vmatprep.subr.mxu0 0.0
    %272 = vmatpush1.xpose.msra.mxu0 0.0
    %273 = vmatprep.subr.mxu0 0.0
    %274 = vmatpush1.xpose.msra.mxu0 0.0
    %275 = vmatprep.subr.mxu0 0.0
    %276 = vmatpush1.xpose.msra.mxu0 0.0
    %277 = vmatprep.subr.mxu0 0.0
    %278 = vmatpush1.xpose.msra.mxu0 0.0
    %279 = vmatprep.subr.mxu0 0.0
    %280 = vmatpush1.xpose.msra.mxu0 0.0
    %281 = vmatprep.subr.mxu0 0.0
    %282 = vmatpush1.xpose.msra.mxu0 0.0
    %283 = vmatprep.subr.mxu0 0.0
    %284 = vmatpush1.xpose.msra.mxu0 0.0
    %285 = vmatprep.subr.mxu0 0.0
    %286 = vmatpush1.xpose.msra.mxu0 0.0
    %287 = vmatprep.subr.mxu0 0.0
    %288 = vmatpush1.xpose.msra.mxu0 0.0
    %289 = vmatprep.subr.mxu0 0.0
    %290 = vmatpush1.xpose.msra.mxu0 0.0
    %291 = vmatprep.subr.mxu0 0.0
    %292 = vmatpush1.xpose.msra.mxu0 0.0
    %293 = vmatprep.subr.mxu0 0.0
    %294 = vmatpush1.xpose.msra.mxu0 0.0
    %295 = vmatprep.subr.mxu0 0.0
    %296 = vmatpush1.xpose.msra.mxu0 0.0
    %297 = vmatprep.subr.mxu0 0.0
    %298 = vmatpush1.xpose.msra.mxu0 0.0
    %299 = vmatprep.subr.mxu0 0.0
    %300 = vmatpush1.xpose.msra.mxu0 0.0
    %301 = vmatprep.subr.mxu0 0.0
    %302 = vmatpush1.xpose.msra.mxu0 0.0
    %303 = vmatprep.subr.mxu0 0.0
    %304 = vmatpush1.xpose.msra.mxu0 0.0
    %305 = vmatprep.subr.mxu0 0.0
    %306 = vmatpush1.xpose.msra.mxu0 0.0
    %307 = vmatprep.mubr.f32.mxu0 0.0
    %308 = vmatmul.mubr.f32.gmra.mrb[0].mxu0 %v235
    %v309 = vpop.f32.mrb[0].mxu0
    %v310 = vadd.f32 0.0, %v309
    %v311 = vpop.f32.mrb[0].mxu0
    %312 = vmatprep.mubr.f32.mxu0 0.0
    %313 = vmatmul.mubr.f32.gmra.mrb[0].mxu0 %v237
    %v314 = vpop.f32.mrb[0].mxu0
    %v315 = vadd.f32 0.0, %v314
    %v316 = vpop.f32.mrb[0].mxu0
    %317 = vdwg.mxu0
    %318 = vrot.lane.b32.xlu0 %v176, 96
    %v319 = vpop.permute.xlu0 %318
    %320 = vrot.lane.b32.xlu0 %v178, 96
    %v321 = vpop.permute.xlu0 %320
    %v322 = vsel %vm234, %v162, 0
    %v324 = vsel %vm234, %v164, 0
    %v326 = vsel %vm234, %v319, 0
    %v328 = vsel %vm234, %v321, 0
    %330 = vmatprep.subr.mxu0 0.0
    %331 = vmatpush1.xpose.msra.mxu0 %v326
    %332 = vmatprep.subr.mxu0 0.0
    %333 = vmatpush1.xpose.msra.mxu0 %v328
    %334 = vmatprep.subr.mxu0 0.0
    %335 = vmatpush1.xpose.msra.mxu0 0.0
    %336 = vmatprep.subr.mxu0 0.0
    %337 = vmatpush1.xpose.msra.mxu0 0.0
    %338 = vmatprep.subr.mxu0 0.0
    %339 = vmatpush1.xpose.msra.mxu0 0.0
    %340 = vmatprep.subr.mxu0 0.0
    %341 = vmatpush1.xpose.msra.mxu0 0.0
    %342 = vmatprep.subr.mxu0 0.0
    %343 = vmatpush1.xpose.msra.mxu0 0.0
    %344 = vmatprep.subr.mxu0 0.0
    %345 = vmatpush1.xpose.msra.mxu0 0.0
    %346 = vmatprep.subr.mxu0 0.0
    %347 = vmatpush1.xpose.msra.mxu0 0.0
    %348 = vmatprep.subr.mxu0 0.0
    %349 = vmatpush1.xpose.msra.mxu0 0.0
    %350 = vmatprep.subr.mxu0 0.0
    %351 = vmatpush1.xpose.msra.mxu0 0.0
    %352 = vmatprep.subr.mxu0 0.0
    %353 = vmatpush1.xpose.msra.mxu0 0.0
    %354 = vmatprep.subr.mxu0 0.0
    %355 = vmatpush1.xpose.msra.mxu0 0.0
    %356 = vmatprep.subr.mxu0 0.0
    %357 = vmatpush1.xpose.msra.mxu0 0.0
    %358 = vmatprep.subr.mxu0 0.0
    %359 = vmatpush1.xpose.msra.mxu0 0.0
    %360 = vmatprep.subr.mxu0 0.0
    %361 = vmatpush1.xpose.msra.mxu0 0.0
    %362 = vmatprep.subr.mxu0 0.0
    %363 = vmatpush1.xpose.msra.mxu0 0.0
    %364 = vmatprep.subr.mxu0 0.0
    %365 = vmatpush1.xpose.msra.mxu0 0.0
    %366 = vmatprep.subr.mxu0 0.0
    %367 = vmatpush1.xpose.msra.mxu0 0.0
    %368 = vmatprep.subr.mxu0 0.0
    %369 = vmatpush1.xpose.msra.mxu0 0.0
    %370 = vmatprep.subr.mxu0 0.0
    %371 = vmatpush1.xpose.msra.mxu0 0.0
    %372 = vmatprep.subr.mxu0 0.0
    %373 = vmatpush1.xpose.msra.mxu0 0.0
    %374 = vmatprep.subr.mxu0 0.0
    %375 = vmatpush1.xpose.msra.mxu0 0.0
    %376 = vmatprep.subr.mxu0 0.0
    %377 = vmatpush1.xpose.msra.mxu0 0.0
    %378 = vmatprep.subr.mxu0 0.0
    %379 = vmatpush1.xpose.msra.mxu0 0.0
    %380 = vmatprep.subr.mxu0 0.0
    %381 = vmatpush1.xpose.msra.mxu0 0.0
    %382 = vmatprep.subr.mxu0 0.0
    %383 = vmatpush1.xpose.msra.mxu0 0.0
    %384 = vmatprep.subr.mxu0 0.0
    %385 = vmatpush1.xpose.msra.mxu0 0.0
    %386 = vmatprep.subr.mxu0 0.0
    %387 = vmatpush1.xpose.msra.mxu0 0.0
    %388 = vmatprep.subr.mxu0 0.0
    %389 = vmatpush1.xpose.msra.mxu0 0.0
    %390 = vmatprep.subr.mxu0 0.0
    %391 = vmatpush1.xpose.msra.mxu0 0.0
    %392 = vmatprep.subr.mxu0 0.0
    %393 = vmatpush1.xpose.msra.mxu0 0.0
    %394 = vmatprep.mubr.f32.mxu0 0.0
    %395 = vmatmul.mubr.f32.gmra.mrb[0].mxu0 %v322
    %v396 = vpop.f32.mrb[0].mxu0
    %v397 = vadd.f32 0.0, %v396
    %v398 = vpop.f32.mrb[0].mxu0
    %399 = vmatprep.mubr.f32.mxu0 0.0
    %400 = vmatmul.mubr.f32.gmra.mrb[0].mxu0 %v324
    %v401 = vpop.f32.mrb[0].mxu0
    %v402 = vadd.f32 0.0, %v401
    %v403 = vpop.f32.mrb[0].mxu0
    %404 = vdwg.mxu0
    %405 = vrot.lane.b32.xlu0 %v180, 96
    %v406 = vpop.permute.xlu0 %405
    %407 = vrot.lane.b32.xlu0 %v182, 96
    %v408 = vpop.permute.xlu0 %407
    %v409 = vsel %vm234, %v166, 0
    %v411 = vsel %vm234, %v168, 0
    %v413 = vsel %vm234, %v406, 0
    %v415 = vsel %vm234, %v408, 0
    %417 = vmatprep.subr.mxu0 0.0
    %418 = vmatpush1.xpose.msra.mxu0 %v413
    %419 = vmatprep.subr.mxu0 0.0
    %420 = vmatpush1.xpose.msra.mxu0 %v415
    %421 = vmatprep.subr.mxu0 0.0
    %422 = vmatpush1.xpose.msra.mxu0 0.0
    %423 = vmatprep.subr.mxu0 0.0
    %424 = vmatpush1.xpose.msra.mxu0 0.0
    %425 = vmatprep.subr.mxu0 0.0
    %426 = vmatpush1.xpose.msra.mxu0 0.0
    %427 = vmatprep.subr.mxu0 0.0
    %428 = vmatpush1.xpose.msra.mxu0 0.0
    %429 = vmatprep.subr.mxu0 0.0
    %430 = vmatpush1.xpose.msra.mxu0 0.0
    %431 = vmatprep.subr.mxu0 0.0
    %432 = vmatpush1.xpose.msra.mxu0 0.0
    %433 = vmatprep.subr.mxu0 0.0
    %434 = vmatpush1.xpose.msra.mxu0 0.0
    %435 = vmatprep.subr.mxu0 0.0
    %436 = vmatpush1.xpose.msra.mxu0 0.0
    %437 = vmatprep.subr.mxu0 0.0
    %438 = vmatpush1.xpose.msra.mxu0 0.0
    %439 = vmatprep.subr.mxu0 0.0
    %440 = vmatpush1.xpose.msra.mxu0 0.0
    %441 = vmatprep.subr.mxu0 0.0
    %442 = vmatpush1.xpose.msra.mxu0 0.0
    %443 = vmatprep.subr.mxu0 0.0
    %444 = vmatpush1.xpose.msra.mxu0 0.0
    %445 = vmatprep.subr.mxu0 0.0
    %446 = vmatpush1.xpose.msra.mxu0 0.0
    %447 = vmatprep.subr.mxu0 0.0
    %448 = vmatpush1.xpose.msra.mxu0 0.0
    %449 = vmatprep.subr.mxu0 0.0
    %450 = vmatpush1.xpose.msra.mxu0 0.0
    %451 = vmatprep.subr.mxu0 0.0
    %452 = vmatpush1.xpose.msra.mxu0 0.0
    %453 = vmatprep.subr.mxu0 0.0
    %454 = vmatpush1.xpose.msra.mxu0 0.0
    %455 = vmatprep.subr.mxu0 0.0
    %456 = vmatpush1.xpose.msra.mxu0 0.0
    %457 = vmatprep.subr.mxu0 0.0
    %458 = vmatpush1.xpose.msra.mxu0 0.0
    %459 = vmatprep.subr.mxu0 0.0
    %460 = vmatpush1.xpose.msra.mxu0 0.0
    %461 = vmatprep.subr.mxu0 0.0
    %462 = vmatpush1.xpose.msra.mxu0 0.0
    %463 = vmatprep.subr.mxu0 0.0
    %464 = vmatpush1.xpose.msra.mxu0 0.0
    %465 = vmatprep.subr.mxu0 0.0
    %466 = vmatpush1.xpose.msra.mxu0 0.0
    %467 = vmatprep.subr.mxu0 0.0
    %468 = vmatpush1.xpose.msra.mxu0 0.0
    %469 = vmatprep.subr.mxu0 0.0
    %470 = vmatpush1.xpose.msra.mxu0 0.0
    %471 = vmatprep.subr.mxu0 0.0
    %472 = vmatpush1.xpose.msra.mxu0 0.0
    %473 = vmatprep.subr.mxu0 0.0
    %474 = vmatpush1.xpose.msra.mxu0 0.0
    %475 = vmatprep.subr.mxu0 0.0
    %476 = vmatpush1.xpose.msra.mxu0 0.0
    %477 = vmatprep.subr.mxu0 0.0
    %478 = vmatpush1.xpose.msra.mxu0 0.0
    %479 = vmatprep.subr.mxu0 0.0
    %480 = vmatpush1.xpose.msra.mxu0 0.0
    %481 = vmatprep.mubr.f32.mxu0 0.0
    %482 = vmatmul.mubr.f32.gmra.mrb[0].mxu0 %v409
    %v483 = vpop.f32.mrb[0].mxu0
    %v484 = vadd.f32 0.0, %v483
    %v485 = vpop.f32.mrb[0].mxu0
    %486 = vmatprep.mubr.f32.mxu0 0.0
    %487 = vmatmul.mubr.f32.gmra.mrb[0].mxu0 %v411
    %v488 = vpop.f32.mrb[0].mxu0
    %v489 = vadd.f32 0.0, %v488
    %v490 = vpop.f32.mrb[0].mxu0
    %491 = vdwg.mxu0
    %492 = vrot.lane.b32.xlu0 %v184, 96
    %v493 = vpop.permute.xlu0 %492
    %494 = vrot.lane.b32.xlu0 %v186, 96
    %v495 = vpop.permute.xlu0 %494
    %v496 = vsel %vm234, %v170, 0
    %v498 = vsel %vm234, %v172, 0
    %v500 = vsel %vm234, %v493, 0
    %v502 = vsel %vm234, %v495, 0
    %504 = vmatprep.subr.mxu0 0.0
    %505 = vmatpush1.xpose.msra.mxu0 %v500
    %506 = vmatprep.subr.mxu0 0.0
    %507 = vmatpush1.xpose.msra.mxu0 %v502
    %508 = vmatprep.subr.mxu0 0.0
    %509 = vmatpush1.xpose.msra.mxu0 0.0
    %510 = vmatprep.subr.mxu0 0.0
    %511 = vmatpush1.xpose.msra.mxu0 0.0
    %512 = vmatprep.subr.mxu0 0.0
    %513 = vmatpush1.xpose.msra.mxu0 0.0
    %514 = vmatprep.subr.mxu0 0.0
    %515 = vmatpush1.xpose.msra.mxu0 0.0
    %516 = vmatprep.subr.mxu0 0.0
    %517 = vmatpush1.xpose.msra.mxu0 0.0
    %518 = vmatprep.subr.mxu0 0.0
    %519 = vmatpush1.xpose.msra.mxu0 0.0
    %520 = vmatprep.subr.mxu0 0.0
    %521 = vmatpush1.xpose.msra.mxu0 0.0
    %522 = vmatprep.subr.mxu0 0.0
    %523 = vmatpush1.xpose.msra.mxu0 0.0
    %524 = vmatprep.subr.mxu0 0.0
    %525 = vmatpush1.xpose.msra.mxu0 0.0
    %526 = vmatprep.subr.mxu0 0.0
    %527 = vmatpush1.xpose.msra.mxu0 0.0
    %528 = vmatprep.subr.mxu0 0.0
    %529 = vmatpush1.xpose.msra.mxu0 0.0
    %530 = vmatprep.subr.mxu0 0.0
    %531 = vmatpush1.xpose.msra.mxu0 0.0
    %532 = vmatprep.subr.mxu0 0.0
    %533 = vmatpush1.xpose.msra.mxu0 0.0
    %534 = vmatprep.subr.mxu0 0.0
    %535 = vmatpush1.xpose.msra.mxu0 0.0
    %536 = vmatprep.subr.mxu0 0.0
    %537 = vmatpush1.xpose.msra.mxu0 0.0
    %538 = vmatprep.subr.mxu0 0.0
    %539 = vmatpush1.xpose.msra.mxu0 0.0
    %540 = vmatprep.subr.mxu0 0.0
    %541 = vmatpush1.xpose.msra.mxu0 0.0
    %542 = vmatprep.subr.mxu0 0.0
    %543 = vmatpush1.xpose.msra.mxu0 0.0
    %544 = vmatprep.subr.mxu0 0.0
    %545 = vmatpush1.xpose.msra.mxu0 0.0
    %546 = vmatprep.subr.mxu0 0.0
    %547 = vmatpush1.xpose.msra.mxu0 0.0
    %548 = vmatprep.subr.mxu0 0.0
    %549 = vmatpush1.xpose.msra.mxu0 0.0
    %550 = vmatprep.subr.mxu0 0.0
    %551 = vmatpush1.xpose.msra.mxu0 0.0
    %552 = vmatprep.subr.mxu0 0.0
    %553 = vmatpush1.xpose.msra.mxu0 0.0
    %554 = vmatprep.subr.mxu0 0.0
    %555 = vmatpush1.xpose.msra.mxu0 0.0
    %556 = vmatprep.subr.mxu0 0.0
    %557 = vmatpush1.xpose.msra.mxu0 0.0
    %558 = vmatprep.subr.mxu0 0.0
    %559 = vmatpush1.xpose.msra.mxu0 0.0
    %560 = vmatprep.subr.mxu0 0.0
    %561 = vmatpush1.xpose.msra.mxu0 0.0
    %562 = vmatprep.subr.mxu0 0.0
    %563 = vmatpush1.xpose.msra.mxu0 0.0
    %564 = vmatprep.subr.mxu0 0.0
    %565 = vmatpush1.xpose.msra.mxu0 0.0
    %566 = vmatprep.subr.mxu0 0.0
    %567 = vmatpush1.xpose.msra.mxu0 0.0
    %568 = vmatprep.mubr.f32.mxu0 0.0
    %569 = vmatmul.mubr.f32.gmra.mrb[0].mxu0 %v496
    %v570 = vpop.f32.mrb[0].mxu0
    %v571 = vadd.f32 0.0, %v570
    %v572 = vpop.f32.mrb[0].mxu0
    %573 = vmatprep.mubr.f32.mxu0 0.0
    %574 = vmatmul.mubr.f32.gmra.mrb[0].mxu0 %v498
    %v575 = vpop.f32.mrb[0].mxu0
    %v576 = vadd.f32 0.0, %v575
    %v577 = vpop.f32.mrb[0].mxu0
    %578 = vdwg.mxu0
    %v579 = vsel %vm228, 1, 0
    %v580 = vsel %vm229, 1, 0
    %vm581 = vcmp.eq.s32.totalorder %v579, 1
    %vm582 = vcmp.eq.s32.totalorder %v580, 1
    %v583 = vsel %vm581, %v310, -1e+30
    %v584 = vsel %vm582, %v315, -1e+30
    %v585 = vsel %vm581, %v397, -1e+30
    %v586 = vsel %vm582, %v402, -1e+30
    %v587 = vsel %vm581, %v484, -1e+30
    %v588 = vsel %vm582, %v489, -1e+30
    %v589 = vsel %vm581, %v571, -1e+30
    %v590 = vsel %vm582, %v576, -1e+30
    %vm591 = vcmask 130048
    %v592 = vsel %vm591, %v583, -inf
    %593 = vmax.xlane.f32.xlu0 %v592
    %v594 = vpop.xlane.xlu0 %593
    %v595 = vsel %vm591, %v584, -inf
    %596 = vmax.xlane.f32.xlu0 %v595
    %v597 = vpop.xlane.xlu0 %596
    %v598 = vsel %vm591, %v585, -inf
    %599 = vmax.xlane.f32.xlu0 %v598
    %v600 = vpop.xlane.xlu0 %599
    %v601 = vsel %vm591, %v586, -inf
    %602 = vmax.xlane.f32.xlu0 %v601
    %v603 = vpop.xlane.xlu0 %602
    %v604 = vsel %vm591, %v587, -inf
    %605 = vmax.xlane.f32.xlu0 %v604
    %v606 = vpop.xlane.xlu0 %605
    %v607 = vsel %vm591, %v588, -inf
    %608 = vmax.xlane.f32.xlu0 %v607
    %v609 = vpop.xlane.xlu0 %608
    %v610 = vsel %vm591, %v589, -inf
    %611 = vmax.xlane.f32.xlu0 %v610
    %v612 = vpop.xlane.xlu0 %611
    %v613 = vsel %vm591, %v590, -inf
    %614 = vmax.xlane.f32.xlu0 %v613
    %v615 = vpop.xlane.xlu0 %614
    %v616 = vsub.f32 %v583, %v594
    %v617 = vsub.f32 %v584, %v597
    %v618 = vsub.f32 %v585, %v600
    %v619 = vsub.f32 %v586, %v603
    %v620 = vsub.f32 %v587, %v606
    %v621 = vsub.f32 %v588, %v609
    %v622 = vsub.f32 %v589, %v612
    %v623 = vsub.f32 %v590, %v615
    %v624 = vmul.f32 %v616, 1.442695
    %v625 = vpow.pop %v624
    %v626 = vmul.f32 %v617, 1.442695
    %v627 = vpow.pop %v626
    %v628 = vmul.f32 %v618, 1.442695
    %v629 = vpow.pop %v628
    %v630 = vmul.f32 %v619, 1.442695
    %v631 = vpow.pop %v630
    %v632 = vmul.f32 %v620, 1.442695
    %v633 = vpow.pop %v632
    %v634 = vmul.f32 %v621, 1.442695
    %v635 = vpow.pop %v634
    %v636 = vmul.f32 %v622, 1.442695
    %v637 = vpow.pop %v636
    %v638 = vmul.f32 %v623, 1.442695
    %v639 = vpow.pop %v638
    %v640 = vsel %vm591, %v625, 0.0
    %641 = vadd.xlane.f32.xlu0 %v640
    %v642 = vpop.xlane.xlu0 %641
    %v643 = vsel %vm591, %v627, 0.0
    %644 = vadd.xlane.f32.xlu0 %v643
    %v645 = vpop.xlane.xlu0 %644
    %v646 = vsel %vm591, %v629, 0.0
    %647 = vadd.xlane.f32.xlu0 %v646
    %v648 = vpop.xlane.xlu0 %647
    %v649 = vsel %vm591, %v631, 0.0
    %650 = vadd.xlane.f32.xlu0 %v649
    %v651 = vpop.xlane.xlu0 %650
    %v652 = vsel %vm591, %v633, 0.0
    %653 = vadd.xlane.f32.xlu0 %v652
    %v654 = vpop.xlane.xlu0 %653
    %v655 = vsel %vm591, %v635, 0.0
    %656 = vadd.xlane.f32.xlu0 %v655
    %v657 = vpop.xlane.xlu0 %656
    %v658 = vsel %vm591, %v637, 0.0
    %659 = vadd.xlane.f32.xlu0 %v658
    %v660 = vpop.xlane.xlu0 %659
    %v661 = vsel %vm591, %v639, 0.0
    %662 = vadd.xlane.f32.xlu0 %v661
    %v663 = vpop.xlane.xlu0 %662
    %v664 = vrcp.pop %v642
    %v665 = vrcp.pop %v645
    %v666 = vrcp.pop %v648
    %v667 = vrcp.pop %v651
    %v668 = vrcp.pop %v654
    %v669 = vrcp.pop %v657
    %v670 = vrcp.pop %v660
    %v671 = vrcp.pop %v663
    %v672 = vmul.f32 %v625, %v664
    %v673 = vmul.f32 %v627, %v665
    %v674 = vmul.f32 %v629, %v666
    %v675 = vmul.f32 %v631, %v667
    %v676 = vmul.f32 %v633, %v668
    %v677 = vmul.f32 %v635, %v669
    %v678 = vmul.f32 %v637, %v670
    %v679 = vmul.f32 %v639, %v671
    %680 = vrot.lane.b32.xlu0 %v149, 64
    %v681 = vpop.permute.xlu0 %680
    %682 = vrot.lane.b32.xlu0 %v154, 64
    %v683 = vpop.permute.xlu0 %682
    %v687 = vsel %vm591, %v672, 0
    %v690 = vsel %vm591, %v673, 0
    %692 = vmatprep.subr.mxu0 0.0
    %693 = vmatpush1.msra.mxu0 %v681
    %694 = vmatprep.subr.mxu0 0.0
    %695 = vmatpush1.msra.mxu0 %v683
    %696 = vmatprep.subr.mxu0 0.0
    %697 = vmatpush1.msra.mxu0 0.0
    %698 = vmatprep.subr.mxu0 0.0
    %699 = vmatpush1.msra.mxu0 0.0
    %700 = vmatprep.subr.mxu0 0.0
    %701 = vmatpush1.msra.mxu0 0.0
    %702 = vmatprep.subr.mxu0 0.0
    %703 = vmatpush1.msra.mxu0 0.0
    %704 = vmatprep.subr.mxu0 0.0
    %705 = vmatpush1.msra.mxu0 0.0
    %706 = vmatprep.subr.mxu0 0.0
    %707 = vmatpush1.msra.mxu0 0.0
    %708 = vmatprep.subr.mxu0 0.0
    %709 = vmatpush1.msra.mxu0 0.0
    %710 = vmatprep.subr.mxu0 0.0
    %711 = vmatpush1.msra.mxu0 0.0
    %712 = vmatprep.subr.mxu0 0.0
    %713 = vmatpush1.msra.mxu0 0.0
    %714 = vmatprep.subr.mxu0 0.0
    %715 = vmatpush1.msra.mxu0 0.0
    %716 = vmatprep.subr.mxu0 0.0
    %717 = vmatpush1.msra.mxu0 0.0
    %718 = vmatprep.subr.mxu0 0.0
    %719 = vmatpush1.msra.mxu0 0.0
    %720 = vmatprep.subr.mxu0 0.0
    %721 = vmatpush1.msra.mxu0 0.0
    %722 = vmatprep.subr.mxu0 0.0
    %723 = vmatpush1.msra.mxu0 0.0
    %724 = vmatprep.subr.mxu0 0.0
    %725 = vmatpush1.msra.mxu0 0.0
    %726 = vmatprep.subr.mxu0 0.0
    %727 = vmatpush1.msra.mxu0 0.0
    %728 = vmatprep.subr.mxu0 0.0
    %729 = vmatpush1.msra.mxu0 0.0
    %730 = vmatprep.subr.mxu0 0.0
    %731 = vmatpush1.msra.mxu0 0.0
    %732 = vmatprep.subr.mxu0 0.0
    %733 = vmatpush1.msra.mxu0 0.0
    %734 = vmatprep.subr.mxu0 0.0
    %735 = vmatpush1.msra.mxu0 0.0
    %736 = vmatprep.subr.mxu0 0.0
    %737 = vmatpush1.msra.mxu0 0.0
    %738 = vmatprep.subr.mxu0 0.0
    %739 = vmatpush1.msra.mxu0 0.0
    %740 = vmatprep.subr.mxu0 0.0
    %741 = vmatpush1.msra.mxu0 0.0
    %742 = vmatprep.subr.mxu0 0.0
    %743 = vmatpush1.msra.mxu0 0.0
    %744 = vmatprep.subr.mxu0 0.0
    %745 = vmatpush1.msra.mxu0 0.0
    %746 = vmatprep.subr.mxu0 0.0
    %747 = vmatpush1.msra.mxu0 0.0
    %748 = vmatprep.subr.mxu0 0.0
    %749 = vmatpush1.msra.mxu0 0.0
    %750 = vmatprep.subr.mxu0 0.0
    %751 = vmatpush1.msra.mxu0 0.0
    %752 = vmatprep.subr.mxu0 0.0
    %753 = vmatpush1.msra.mxu0 0.0
    %754 = vmatprep.subr.mxu0 0.0
    %755 = vmatpush1.msra.mxu0 0.0
    %756 = vmatprep.mubr.f32.mxu0 0.0
    %757 = vmatmul.mubr.f32.gmra.mrb[0].mxu0 %v687
    %v758 = vpop.f32.mrb[0].mxu0
    %v759 = vadd.f32 0.0, %v758
    %v760 = vpop.f32.mrb[0].mxu0
    %761 = vmatprep.mubr.f32.mxu0 0.0
    %762 = vmatmul.mubr.f32.gmra.mrb[0].mxu0 %v690
    %v763 = vpop.f32.mrb[0].mxu0
    %v764 = vadd.f32 0.0, %v763
    %v765 = vpop.f32.mrb[0].mxu0
    %766 = vdwg.mxu0
    %767 = vrot.lane.b32.xlu0 %v176, 64
    %v768 = vpop.permute.xlu0 %767
    %769 = vrot.lane.b32.xlu0 %v178, 64
    %v770 = vpop.permute.xlu0 %769
    %v774 = vsel %vm591, %v674, 0
    %v777 = vsel %vm591, %v675, 0
    %779 = vmatprep.subr.mxu0 0.0
    %780 = vmatpush1.msra.mxu0 %v768
    %781 = vmatprep.subr.mxu0 0.0
    %782 = vmatpush1.msra.mxu0 %v770
    %783 = vmatprep.subr.mxu0 0.0
    %784 = vmatpush1.msra.mxu0 0.0
    %785 = vmatprep.subr.mxu0 0.0
    %786 = vmatpush1.msra.mxu0 0.0
    %787 = vmatprep.subr.mxu0 0.0
    %788 = vmatpush1.msra.mxu0 0.0
    %789 = vmatprep.subr.mxu0 0.0
    %790 = vmatpush1.msra.mxu0 0.0
    %791 = vmatprep.subr.mxu0 0.0
    %792 = vmatpush1.msra.mxu0 0.0
    %793 = vmatprep.subr.mxu0 0.0
    %794 = vmatpush1.msra.mxu0 0.0
    %795 = vmatprep.subr.mxu0 0.0
    %796 = vmatpush1.msra.mxu0 0.0
    %797 = vmatprep.subr.mxu0 0.0
    %798 = vmatpush1.msra.mxu0 0.0
    %799 = vmatprep.subr.mxu0 0.0
    %800 = vmatpush1.msra.mxu0 0.0
    %801 = vmatprep.subr.mxu0 0.0
    %802 = vmatpush1.msra.mxu0 0.0
    %803 = vmatprep.subr.mxu0 0.0
    %804 = vmatpush1.msra.mxu0 0.0
    %805 = vmatprep.subr.mxu0 0.0
    %806 = vmatpush1.msra.mxu0 0.0
    %807 = vmatprep.subr.mxu0 0.0
    %808 = vmatpush1.msra.mxu0 0.0
    %809 = vmatprep.subr.mxu0 0.0
    %810 = vmatpush1.msra.mxu0 0.0
    %811 = vmatprep.subr.mxu0 0.0
    %812 = vmatpush1.msra.mxu0 0.0
    %813 = vmatprep.subr.mxu0 0.0
    %814 = vmatpush1.msra.mxu0 0.0
    %815 = vmatprep.subr.mxu0 0.0
    %816 = vmatpush1.msra.mxu0 0.0
    %817 = vmatprep.subr.mxu0 0.0
    %818 = vmatpush1.msra.mxu0 0.0
    %819 = vmatprep.subr.mxu0 0.0
    %820 = vmatpush1.msra.mxu0 0.0
    %821 = vmatprep.subr.mxu0 0.0
    %822 = vmatpush1.msra.mxu0 0.0
    %823 = vmatprep.subr.mxu0 0.0
    %824 = vmatpush1.msra.mxu0 0.0
    %825 = vmatprep.subr.mxu0 0.0
    %826 = vmatpush1.msra.mxu0 0.0
    %827 = vmatprep.subr.mxu0 0.0
    %828 = vmatpush1.msra.mxu0 0.0
    %829 = vmatprep.subr.mxu0 0.0
    %830 = vmatpush1.msra.mxu0 0.0
    %831 = vmatprep.subr.mxu0 0.0
    %832 = vmatpush1.msra.mxu0 0.0
    %833 = vmatprep.subr.mxu0 0.0
    %834 = vmatpush1.msra.mxu0 0.0
    %835 = vmatprep.subr.mxu0 0.0
    %836 = vmatpush1.msra.mxu0 0.0
    %837 = vmatprep.subr.mxu0 0.0
    %838 = vmatpush1.msra.mxu0 0.0
    %839 = vmatprep.subr.mxu0 0.0
    %840 = vmatpush1.msra.mxu0 0.0
    %841 = vmatprep.subr.mxu0 0.0
    %842 = vmatpush1.msra.mxu0 0.0
    %843 = vmatprep.mubr.f32.mxu0 0.0
    %844 = vmatmul.mubr.f32.gmra.mrb[0].mxu0 %v774
    %v845 = vpop.f32.mrb[0].mxu0
    %v846 = vadd.f32 0.0, %v845
    %v847 = vpop.f32.mrb[0].mxu0
    %848 = vmatprep.mubr.f32.mxu0 0.0
    %849 = vmatmul.mubr.f32.gmra.mrb[0].mxu0 %v777
    %v850 = vpop.f32.mrb[0].mxu0
    %v851 = vadd.f32 0.0, %v850
    %v852 = vpop.f32.mrb[0].mxu0
    %853 = vdwg.mxu0
    %854 = vrot.lane.b32.xlu0 %v180, 64
    %v855 = vpop.permute.xlu0 %854
    %856 = vrot.lane.b32.xlu0 %v182, 64
    %v857 = vpop.permute.xlu0 %856
    %v861 = vsel %vm591, %v676, 0
    %v864 = vsel %vm591, %v677, 0
    %866 = vmatprep.subr.mxu0 0.0
    %867 = vmatpush1.msra.mxu0 %v855
    %868 = vmatprep.subr.mxu0 0.0
    %869 = vmatpush1.msra.mxu0 %v857
    %870 = vmatprep.subr.mxu0 0.0
    %871 = vmatpush1.msra.mxu0 0.0
    %872 = vmatprep.subr.mxu0 0.0
    %873 = vmatpush1.msra.mxu0 0.0
    %874 = vmatprep.subr.mxu0 0.0
    %875 = vmatpush1.msra.mxu0 0.0
    %876 = vmatprep.subr.mxu0 0.0
    %877 = vmatpush1.msra.mxu0 0.0
    %878 = vmatprep.subr.mxu0 0.0
    %879 = vmatpush1.msra.mxu0 0.0
    %880 = vmatprep.subr.mxu0 0.0
    %881 = vmatpush1.msra.mxu0 0.0
    %882 = vmatprep.subr.mxu0 0.0
    %883 = vmatpush1.msra.mxu0 0.0
    %884 = vmatprep.subr.mxu0 0.0
    %885 = vmatpush1.msra.mxu0 0.0
    %886 = vmatprep.subr.mxu0 0.0
    %887 = vmatpush1.msra.mxu0 0.0
    %888 = vmatprep.subr.mxu0 0.0
    %889 = vmatpush1.msra.mxu0 0.0
    %890 = vmatprep.subr.mxu0 0.0
    %891 = vmatpush1.msra.mxu0 0.0
    %892 = vmatprep.subr.mxu0 0.0
    %893 = vmatpush1.msra.mxu0 0.0
    %894 = vmatprep.subr.mxu0 0.0
    %895 = vmatpush1.msra.mxu0 0.0
    %896 = vmatprep.subr.mxu0 0.0
    %897 = vmatpush1.msra.mxu0 0.0
    %898 = vmatprep.subr.mxu0 0.0
    %899 = vmatpush1.msra.mxu0 0.0
    %900 = vmatprep.subr.mxu0 0.0
    %901 = vmatpush1.msra.mxu0 0.0
    %902 = vmatprep.subr.mxu0 0.0
    %903 = vmatpush1.msra.mxu0 0.0
    %904 = vmatprep.subr.mxu0 0.0
    %905 = vmatpush1.msra.mxu0 0.0
    %906 = vmatprep.subr.mxu0 0.0
    %907 = vmatpush1.msra.mxu0 0.0
    %908 = vmatprep.subr.mxu0 0.0
    %909 = vmatpush1.msra.mxu0 0.0
    %910 = vmatprep.subr.mxu0 0.0
    %911 = vmatpush1.msra.mxu0 0.0
    %912 = vmatprep.subr.mxu0 0.0
    %913 = vmatpush1.msra.mxu0 0.0
    %914 = vmatprep.subr.mxu0 0.0
    %915 = vmatpush1.msra.mxu0 0.0
    %916 = vmatprep.subr.mxu0 0.0
    %917 = vmatpush1.msra.mxu0 0.0
    %918 = vmatprep.subr.mxu0 0.0
    %919 = vmatpush1.msra.mxu0 0.0
    %920 = vmatprep.subr.mxu0 0.0
    %921 = vmatpush1.msra.mxu0 0.0
    %922 = vmatprep.subr.mxu0 0.0
    %923 = vmatpush1.msra.mxu0 0.0
    %924 = vmatprep.subr.mxu0 0.0
    %925 = vmatpush1.msra.mxu0 0.0
    %926 = vmatprep.subr.mxu0 0.0
    %927 = vmatpush1.msra.mxu0 0.0
    %928 = vmatprep.subr.mxu0 0.0
    %929 = vmatpush1.msra.mxu0 0.0
    %930 = vmatprep.mubr.f32.mxu0 0.0
    %931 = vmatmul.mubr.f32.gmra.mrb[0].mxu0 %v861
    %v932 = vpop.f32.mrb[0].mxu0
    %v933 = vadd.f32 0.0, %v932
    %v934 = vpop.f32.mrb[0].mxu0
    %935 = vmatprep.mubr.f32.mxu0 0.0
    %936 = vmatmul.mubr.f32.gmra.mrb[0].mxu0 %v864
    %v937 = vpop.f32.mrb[0].mxu0
    %v938 = vadd.f32 0.0, %v937
    %v939 = vpop.f32.mrb[0].mxu0
    %940 = vdwg.mxu0
    %941 = vrot.lane.b32.xlu0 %v184, 64
    %v942 = vpop.permute.xlu0 %941
    %943 = vrot.lane.b32.xlu0 %v186, 64
    %v944 = vpop.permute.xlu0 %943
    %v948 = vsel %vm591, %v678, 0
    %v951 = vsel %vm591, %v679, 0
    %953 = vmatprep.subr.mxu0 0.0
    %954 = vmatpush1.msra.mxu0 %v942
    %955 = vmatprep.subr.mxu0 0.0
    %956 = vmatpush1.msra.mxu0 %v944
    %957 = vmatprep.subr.mxu0 0.0
    %958 = vmatpush1.msra.mxu0 0.0
    %959 = vmatprep.subr.mxu0 0.0
    %960 = vmatpush1.msra.mxu0 0.0
    %961 = vmatprep.subr.mxu0 0.0
    %962 = vmatpush1.msra.mxu0 0.0
    %963 = vmatprep.subr.mxu0 0.0
    %964 = vmatpush1.msra.mxu0 0.0
    %965 = vmatprep.subr.mxu0 0.0
    %966 = vmatpush1.msra.mxu0 0.0
    %967 = vmatprep.subr.mxu0 0.0
    %968 = vmatpush1.msra.mxu0 0.0
    %969 = vmatprep.subr.mxu0 0.0
    %970 = vmatpush1.msra.mxu0 0.0
    %971 = vmatprep.subr.mxu0 0.0
    %972 = vmatpush1.msra.mxu0 0.0
    %973 = vmatprep.subr.mxu0 0.0
    %974 = vmatpush1.msra.mxu0 0.0
    %975 = vmatprep.subr.mxu0 0.0
    %976 = vmatpush1.msra.mxu0 0.0
    %977 = vmatprep.subr.mxu0 0.0
    %978 = vmatpush1.msra.mxu0 0.0
    %979 = vmatprep.subr.mxu0 0.0
    %980 = vmatpush1.msra.mxu0 0.0
    %981 = vmatprep.subr.mxu0 0.0
    %982 = vmatpush1.msra.mxu0 0.0
    %983 = vmatprep.subr.mxu0 0.0
    %984 = vmatpush1.msra.mxu0 0.0
    %985 = vmatprep.subr.mxu0 0.0
    %986 = vmatpush1.msra.mxu0 0.0
    %987 = vmatprep.subr.mxu0 0.0
    %988 = vmatpush1.msra.mxu0 0.0
    %989 = vmatprep.subr.mxu0 0.0
    %990 = vmatpush1.msra.mxu0 0.0
    %991 = vmatprep.subr.mxu0 0.0
    %992 = vmatpush1.msra.mxu0 0.0
    %993 = vmatprep.subr.mxu0 0.0
    %994 = vmatpush1.msra.mxu0 0.0
    %995 = vmatprep.subr.mxu0 0.0
    %996 = vmatpush1.msra.mxu0 0.0
    %997 = vmatprep.subr.mxu0 0.0
    %998 = vmatpush1.msra.mxu0 0.0
    %999 = vmatprep.subr.mxu0 0.0
    %1000 = vmatpush1.msra.mxu0 0.0
    %1001 = vmatprep.subr.mxu0 0.0
    %1002 = vmatpush1.msra.mxu0 0.0
    %1003 = vmatprep.subr.mxu0 0.0
    %1004 = vmatpush1.msra.mxu0 0.0
    %1005 = vmatprep.subr.mxu0 0.0
    %1006 = vmatpush1.msra.mxu0 0.0
    %1007 = vmatprep.subr.mxu0 0.0
    %1008 = vmatpush1.msra.mxu0 0.0
    %1009 = vmatprep.subr.mxu0 0.0
    %1010 = vmatpush1.msra.mxu0 0.0
    %1011 = vmatprep.subr.mxu0 0.0
    %1012 = vmatpush1.msra.mxu0 0.0
    %1013 = vmatprep.subr.mxu0 0.0
    %1014 = vmatpush1.msra.mxu0 0.0
    %1015 = vmatprep.subr.mxu0 0.0
    %1016 = vmatpush1.msra.mxu0 0.0
    %1017 = vmatprep.mubr.f32.mxu0 0.0
    %1018 = vmatmul.mubr.f32.gmra.mrb[0].mxu0 %v948
    %v1019 = vpop.f32.mrb[0].mxu0
    %v1020 = vadd.f32 0.0, %v1019
    %v1021 = vpop.f32.mrb[0].mxu0
    %1022 = vmatprep.mubr.f32.mxu0 0.0
    %1023 = vmatmul.mubr.f32.gmra.mrb[0].mxu0 %v951
    %v1024 = vpop.f32.mrb[0].mxu0
    %v1025 = vadd.f32 0.0, %v1024
    %v1026 = vpop.f32.mrb[0].mxu0
    %1027 = vdwg.mxu0
    %1030 = vrot.lane.b32.xlu0 %v846, 8
    %v1031 = vpop.permute.xlu0 %1030
    %1032 = vrot.lane.b32.xlu0 %v851, 8
    %v1033 = vpop.permute.xlu0 %1032
    %1038 = vrot.lane.b32.xlu0 %v933, 16
    %v1039 = vpop.permute.xlu0 %1038
    %1040 = vrot.lane.b32.xlu0 %v938, 16
    %v1041 = vpop.permute.xlu0 %1040
    %1046 = vrot.lane.b32.xlu0 %v1020, 24
    %v1047 = vpop.permute.xlu0 %1046
    %1048 = vrot.lane.b32.xlu0 %v1025, 24
    %v1049 = vpop.permute.xlu0 %1048
    %v1052 = vsel %vm234, %v759, %v1031
    %v1053 = vsel %vm234, %v764, %v1033
    %v1054 = vsel %vm591, %v1052, %v1039
    %v1055 = vsel %vm591, %v1053, %v1041
    %vm1056 = vcmask 195584
    %v1057 = vsel %vm1056, %v1054, %v1047
    %v1058 = vsel %vm1056, %v1055, %v1049
    %v1059 = vld [vmem:[#allocation7] sm:$0xff]
    %v1060 = vld [vmem:[#allocation7 + $0x8] sm:$0xff]
    %v1061 = vld [vmem:[#allocation7 + $0x10] sm:$0xff]
    %v1062 = vld [vmem:[#allocation7 + $0x18] sm:$0xff]
    %v1063 = vld [vmem:[%s4] sm:$0x1]
    %v1065 = vlaneseq
    %v1066 = vshrl.u32 %v1065, 7
    %v1067 = vsub.s32 0, %v1066
    %v1068 = vrot.slane %v1063, %v1067
    %v1071 = vsel %vm75, %v1057, 0
    %v1074 = vsel %vm75, %v1058, 0
    %1076 = vmatprep.subr.mxu0 0.0
    %1077 = vmatpush1.msra.mxu0 %v1059
    %1078 = vmatprep.subr.mxu0 0.0
    %1079 = vmatpush1.msra.mxu0 %v1060
    %1080 = vmatprep.subr.mxu0 0.0
    %1081 = vmatpush1.msra.mxu0 %v1061
    %1082 = vmatprep.subr.mxu0 0.0
    %1083 = vmatpush1.msra.mxu0 %v1062
    %1084 = vmatprep.subr.mxu0 0.0
    %1085 = vmatpush1.msra.mxu0 0.0
    %1086 = vmatprep.subr.mxu0 0.0
    %1087 = vmatpush1.msra.mxu0 0.0
    %1088 = vmatprep.subr.mxu0 0.0
    %1089 = vmatpush1.msra.mxu0 0.0
    %1090 = vmatprep.subr.mxu0 0.0
    %1091 = vmatpush1.msra.mxu0 0.0
    %1092 = vmatprep.subr.mxu0 0.0
    %1093 = vmatpush1.msra.mxu0 0.0
    %1094 = vmatprep.subr.mxu0 0.0
    %1095 = vmatpush1.msra.mxu0 0.0
    %1096 = vmatprep.subr.mxu0 0.0
    %1097 = vmatpush1.msra.mxu0 0.0
    %1098 = vmatprep.subr.mxu0 0.0
    %1099 = vmatpush1.msra.mxu0 0.0
    %1100 = vmatprep.subr.mxu0 0.0
    %1101 = vmatpush1.msra.mxu0 0.0
    %1102 = vmatprep.subr.mxu0 0.0
    %1103 = vmatpush1.msra.mxu0 0.0
    %1104 = vmatprep.subr.mxu0 0.0
    %1105 = vmatpush1.msra.mxu0 0.0
    %1106 = vmatprep.subr.mxu0 0.0
    %1107 = vmatpush1.msra.mxu0 0.0
    %1108 = vmatprep.subr.mxu0 0.0
    %1109 = vmatpush1.msra.mxu0 0.0
    %1110 = vmatprep.subr.mxu0 0.0
    %1111 = vmatpush1.msra.mxu0 0.0
    %1112 = vmatprep.subr.mxu0 0.0
    %1113 = vmatpush1.msra.mxu0 0.0
    %1114 = vmatprep.subr.mxu0 0.0
    %1115 = vmatpush1.msra.mxu0 0.0
    %1116 = vmatprep.subr.mxu0 0.0
    %1117 = vmatpush1.msra.mxu0 0.0
    %1118 = vmatprep.subr.mxu0 0.0
    %1119 = vmatpush1.msra.mxu0 0.0
    %1120 = vmatprep.subr.mxu0 0.0
    %1121 = vmatpush1.msra.mxu0 0.0
    %1122 = vmatprep.subr.mxu0 0.0
    %1123 = vmatpush1.msra.mxu0 0.0
    %1124 = vmatprep.subr.mxu0 0.0
    %1125 = vmatpush1.msra.mxu0 0.0
    %1126 = vmatprep.subr.mxu0 0.0
    %1127 = vmatpush1.msra.mxu0 0.0
    %1128 = vmatprep.subr.mxu0 0.0
    %1129 = vmatpush1.msra.mxu0 0.0
    %1130 = vmatprep.subr.mxu0 0.0
    %1131 = vmatpush1.msra.mxu0 0.0
    %1132 = vmatprep.subr.mxu0 0.0
    %1133 = vmatpush1.msra.mxu0 0.0
    %1134 = vmatprep.subr.mxu0 0.0
    %1135 = vmatpush1.msra.mxu0 0.0
    %1136 = vmatprep.subr.mxu0 0.0
    %1137 = vmatpush1.msra.mxu0 0.0
    %1138 = vmatprep.subr.mxu0 0.0
    %1139 = vmatpush1.msra.mxu0 0.0
    %1140 = vmatprep.mubr.f32.mxu0 0.0
    %1141 = vmatmul.mubr.f32.gmra.mrb[0].mxu0 %v1071
    %v1142 = vpop.f32.mrb[0].mxu0
    %v1143 = vadd.f32 %v1068, %v1142
    %v1144 = vpop.f32.mrb[0].mxu0
    %1145 = vmatprep.mubr.f32.mxu0 0.0
    %1146 = vmatmul.mubr.f32.gmra.mrb[0].mxu0 %v1074
    %v1147 = vpop.f32.mrb[0].mxu0
    %v1148 = vadd.f32 %v1068, %v1147
    %v1149 = vpop.f32.mrb[0].mxu0
    %1150 = vdwg.mxu0
    %1151 = vst.msk [vmem:[#allocation8] sm:$0xff] %vm75, %v1143
    %1152 = vst.msk [vmem:[#allocation8 + $0x8] sm:$0xff] %vm75, %v1148
    // Predicated region
    $region34: #{tpu_custom_call.1} parent=1 // pred_check
      _
    $region35: #{tpu_custom_call.1} parent=1 // pred_check_branch
      %1154 = sbr.rel (0) target = $region37
    $region36: #{tpu_custom_call.1} parent=1 // pred_region
      %s1156 = ssub.s32 256, 256
      %1157 = vsyncadd [#allocation4], %s1156
      %s1158 = sshll.u32 [#allocation8], 4
      %s1159 = int_to_ptr.vmem [resolvable:$true] %s1158
      %1164 = dma.vmem_to_hbm [thread:$0]  %s1159, 256, %s5, [#allocation4], 128, 128, 8
    $region37: #{tpu_custom_call.1} parent=1 // pred_fallthru
      _
    // Predicated region
    $region38: #{tpu_custom_call.1} parent=1 // pred_check
      _
    $region39: #{tpu_custom_call.1} parent=1 // pred_check_branch
      %1166 = sbr.rel (0) target = $region41
    $region40: #{tpu_custom_call.1} parent=1 // pred_region
      %1167 = dma.done [#allocation4], 256
    $region41: #{tpu_custom_call.1} parent=1 // pred_fallthru
      _
    %1168 = vsyncpa [#allocation3], 1
    %1169 = vsyncpa [#allocation6], 1
    %1170 = vsyncpa [#allocation4], 1

</llo_original>
